<compile_context>
chip_gen: v5e
topology: v5e:2x2
jax: 0.10.0
libtpu: 0.0.40
codegen_flags: <defaults>
</compile_context>

<pallas_src>
import math

import jax
import jax.numpy as jnp
from jax import lax
from jax.experimental import pallas as pl
from jax.experimental.pallas import tpu as pltpu

_MiB = 1024 * 1024


# ---------------------------------------------------------------------------
# Generation-aware VMEM sizing
# ---------------------------------------------------------------------------
def _vmem_limit_bytes():
    """Safe scoped-VMEM limit for the current TPU generation."""
    cap = 64 * _MiB  # conservative (v7x-sized) fallback if the query fails
    try:
        cap = int(pltpu.get_tpu_info().vmem_capacity_bytes)
    except Exception:
        pass
    if cap <= 64 * _MiB:
        # v7x: 64 MiB per TensorCore -> leave headroom for Mosaic internals.
        return cap - 10 * _MiB
    # v5e / v6e: 128 MiB physical -> raise well above the 16/32 MiB default.
    return min(cap - 28 * _MiB, 100 * _MiB)


def _pick_row_tile(N, edge_dim, out_feats, adj_itemsize, x_itemsize,
                   out_itemsize, vmem_limit_bytes):
    """Largest legal adj row tile under full VMEM accounting.

    Accounts for: double-buffered (edge_dim, tm, N) adj slab, the resident X
    (assumed double-buffered since its BlockSpec index is constant), bias,
    the double-buffered (tm, edge_dim*out_feats) output block, and ~2 MiB of
    Mosaic internal scratch.
    """
    resident = 2 * N * out_feats * x_itemsize          # X buffers
    resident += 2 * out_feats * 4                      # bias buffers
    internal = 2 * _MiB                                # Mosaic internal scratch
    budget = vmem_limit_bytes - resident - internal
    per_row = 2 * edge_dim * (N * adj_itemsize + out_feats * out_itemsize)
    tm = budget // per_row if per_row > 0 else N
    if tm < 8:
        # TODO(synk): K-tiled contraction (accumulator scratch + pl.when
        # init/finalize) when a full resident (N, O) X no longer fits.
        tm = 8
    if tm >= N:
        tm = N
        # Guarantee >= 2 row tiles so both v7x TensorCores get work and DMA of
        # tile i+1 overlaps compute of tile i.
        if N >= 16:
            tm = max(8, (((N + 1) // 2) // 8) * 8)
    else:
        tm = (tm // 8) * 8
    return int(tm)


# ---------------------------------------------------------------------------
# Prologue: shared linear layer X = H @ W.T  (row-tiled, runs once)
# ---------------------------------------------------------------------------
def _linear_kernel(h_ref, w_ref, x_ref):
    # Contract the feature axis of both operands on the MXU (no in-kernel .T).
    x_ref[...] = lax.dot_general(
        h_ref[...], w_ref[...],
        dimension_numbers=(((1,), (1,)), ((), ())),
        preferred_element_type=jnp.float32,
    ).astype(x_ref.dtype)


def _project_node_feats(node_feat, weight, out_dtype, row_tile=1024):
    N, F = node_feat.shape
    O = weight.shape[0]
    tm = N if N <= row_tile else row_tile
    return pl.pallas_call(
        _linear_kernel,
        out_shape=jax.ShapeDtypeStruct((N, O), out_dtype),
        grid=(pl.cdiv(N, tm),),
        in_specs=[
            pl.BlockSpec((tm, F), lambda i: (i, 0)),
            pl.BlockSpec((O, F), lambda i: (0, 0)),     # weight resident
        ],
        out_specs=pl.BlockSpec((tm, O), lambda i: (i, 0)),
        compiler_params=pltpu.CompilerParams(
            dimension_semantics=("parallel",)),
    )(node_feat, weight)


# ---------------------------------------------------------------------------
# Main: per row tile, out[:, e*O:(e+1)*O] = adj[e] @ X + b  for all edge dims
# ---------------------------------------------------------------------------
def ef_conv(adj, node_feat, weight, bias, *, edge_dim, in_feats, out_feats,
            compute_dtype=jnp.bfloat16, row_tile=None):
    """adj: (E, N, N), node_feat: (N, F), weight: (O, F), bias: (O,).

    Returns (N, E*O) == torch.cat([adj[e] @ node_feat @ W.T + b], dim=-1).
    compute_dtype controls the dtype of the streamed adj and resident X
    (accumulation is always f32); use jnp.float32 for bit-faithful precision.
    """
    N = node_feat.shape[0]
    assert node_feat.shape[1] == in_feats  # TODO(synk): wide node_feat branch
    assert adj.shape == (edge_dim, N, N)

    compute_dtype = jnp.dtype(compute_dtype)
    out_dtype = node_feat.dtype

    # Prologue: shared linear layer, computed exactly once (f32 accumulate).
    x = _project_node_feats(node_feat, weight, compute_dtype)        # (N, O)
    adj_c = adj.astype(compute_dtype)        # halves the dominant HBM stream
    b2 = bias.reshape(1, out_feats).astype(jnp.float32)              # (1, O)

    vmem_limit = _vmem_limit_bytes()
    tm = row_tile if row_tile is not None else _pick_row_tile(
        N, edge_dim, out_feats, adj_c.dtype.itemsize, x.dtype.itemsize,
        jnp.dtype(out_dtype).itemsize, vmem_limit)
    grid = (pl.cdiv(N, tm),)

    def agg_kernel(adj_ref, x_ref, b_ref, o_ref):
        # adj_ref: (E, TM, N)   row tile of weighted adjacency, all edge dims
        # x_ref  : (N, O)       projected node features (resident across grid)
        # b_ref  : (1, O)       bias, f32 (resident across grid)
        # o_ref  : (TM, E*O)    concatenated output block for this row tile
        x_v = x_ref[...]
        b_v = b_ref[...]                    # f32 epilogue (v5e VPU has no bf16)
        for e in range(edge_dim):           # static unroll over edge dims
            agg = jnp.dot(adj_ref[e], x_v, preferred_element_type=jnp.float32)
            # Retire each edge-dim result immediately: short live ranges,
            # no concatenate relayout, no spill pressure.
            o_ref[:, e * out_feats:(e + 1) * out_feats] = (
                (agg + b_v).astype(o_ref.dtype))

    cost = pl.CostEstimate(
        flops=2 * edge_dim * N * N * out_feats,
        transcendentals=0,
        bytes_accessed=(adj_c.size * adj_c.dtype.itemsize
                        + x.size * x.dtype.itemsize
                        + N * edge_dim * out_feats
                        * jnp.dtype(out_dtype).itemsize),
    )

    out = pl.pallas_call(
        agg_kernel,
        out_shape=jax.ShapeDtypeStruct((N, edge_dim * out_feats), out_dtype),
        grid=grid,
        in_specs=[
            pl.BlockSpec((edge_dim, tm, N), lambda i: (0, i, 0)),  # adj tile
            pl.BlockSpec((N, out_feats), lambda i: (0, 0)),        # X resident
            pl.BlockSpec((1, out_feats), lambda i: (0, 0)),        # bias resid.
        ],
        out_specs=pl.BlockSpec((tm, edge_dim * out_feats), lambda i: (i, 0)),
        compiler_params=pltpu.CompilerParams(
            dimension_semantics=("parallel",),
            vmem_limit_bytes=int(vmem_limit),
        ),
        cost_estimate=cost,
    )(adj_c, x, b2)

    return out  # already in torch.cat(fstack, dim=-1) layout: (N, E*O)


if __name__ == "__main__":
    N, in_feats, out_feats, edge_dim = 16, 8, 8, 3

    key = jax.random.PRNGKey(0)
    k_h, k_ef, k_mask, k_w, k_b = jax.random.split(key, 5)

    # node features
    node_feat = jax.random.normal(k_h, (N, in_feats), dtype=jnp.float32)

    # dense edge features per (dst, src) pair, masked to a sparse graph with
    # self loops (as the module docstring recommends)
    ef = jax.random.normal(k_ef, (edge_dim, N, N), dtype=jnp.float32)
    mask = (jax.random.uniform(k_mask, (N, N)) < 0.3).astype(jnp.float32)
    mask = jnp.maximum(mask, jnp.eye(N, dtype=jnp.float32))
    adj = ef * mask[None, :, :]

    # parameters: Xavier normal (relu gain) weight, default nn.Linear bias init
    gain = math.sqrt(2.0)
    std = gain * math.sqrt(2.0 / (in_feats + out_feats))
    weight = std * jax.random.normal(k_w, (out_feats, in_feats),
                                     dtype=jnp.float32)
    bound = 1.0 / math.sqrt(in_feats)
    bias = jax.random.uniform(k_b, (out_feats,), minval=-bound, maxval=bound,
                              dtype=jnp.float32)

    # pure-JAX reference of the torch forward (sum reducer, no activation)
    ref_parts = []
    for e in range(edge_dim):
        agg = adj[e] @ node_feat
        ref_parts.append(agg @ weight.T + bias)
    ref = jnp.concatenate(ref_parts, axis=-1)

    # exact-precision path (compute_dtype = f32) -> tight tolerance
    out_f32 = ef_conv(adj, node_feat, weight, bias,
                      edge_dim=edge_dim, in_feats=in_feats,
                      out_feats=out_feats, compute_dtype=jnp.float32)
    out_f32 = jax.block_until_ready(out_f32)
    assert out_f32.shape == (N, edge_dim * out_feats)
    assert jnp.allclose(out_f32, ref, atol=1e-4, rtol=1e-4), "f32 mismatch"

    # default fast path: bf16 adj/X stream, f32 accumulation + epilogue
    out_fast = ef_conv(adj, node_feat, weight, bias,
                       edge_dim=edge_dim, in_feats=in_feats,
                       out_feats=out_feats)
    out_fast = jax.block_until_ready(out_fast)
    assert out_fast.shape == (N, edge_dim * out_feats)
    assert jnp.allclose(out_fast, ref, atol=2e-1, rtol=1e-1), "bf16 mismatch"

    print("KERNEL_OK")
</pallas_src>

<mosaic_0001>
module attributes {stable_mosaic.version = 11 : i64} {
  func.func @_linear_kernel(%arg0: i32, %arg1: memref<16x8xf32, #tpu.memory_space<vmem>>, %arg2: memref<8x8xf32, #tpu.memory_space<vmem>>, %arg3: memref<16x8xf32, #tpu.memory_space<vmem>>) attributes {dimension_semantics = [#tpu.dimension_semantics<parallel>], iteration_bounds = array<i64: 1>, scalar_prefetch = 0 : i64, scratch_operands = 0 : i64, tpu.core_type = #tpu.core_type<tc>, window_params = [{transform_indices = @transform_0, window_bounds = array<i64: 16, 8>}, {pipeline_mode = #tpu.pipeline_mode<synchronous>, transform_indices = @transform_1, window_bounds = array<i64: 8, 8>}, {transform_indices = @transform_2, window_bounds = array<i64: 16, 8>}]} {
    %c0 = arith.constant 0 : index
    %c0_0 = arith.constant 0 : index
    %0 = vector.load %arg1[%c0, %c0_0] : memref<16x8xf32, #tpu.memory_space<vmem>>, vector<16x8xf32>
    %c0_1 = arith.constant 0 : index
    %c0_2 = arith.constant 0 : index
    %1 = vector.load %arg2[%c0_1, %c0_2] : memref<8x8xf32, #tpu.memory_space<vmem>>, vector<8x8xf32>
    %cst = arith.constant dense<0.000000e+00> : vector<16x8xf32>
    %2 = tpu.matmul %0, %1, %cst {dimension_numbers = #tpu.dot_dimension_numbers<[1], [1], [0], [0], [0, 0, 1, 0], [], []>} : vector<16x8xf32>, vector<8x8xf32>, vector<16x8xf32> -> vector<16x8xf32>
    %c0_3 = arith.constant 0 : index
    %c0_4 = arith.constant 0 : index
    %3 = vector.load %arg3[%c0_3, %c0_4] : memref<16x8xf32, #tpu.memory_space<vmem>>, vector<16x8xf32>
    tpu.vector_store %arg3[%c0_3, %c0_4], %2 {strides = array<i32>} : memref<16x8xf32, #tpu.memory_space<vmem>>, vector<16x8xf32>,
    return
  }
  func.func @transform_0(%arg0: i32) -> (i32, i32) {
    %c0_i32 = arith.constant 0 : i32
    %c0_i32_0 = arith.constant 0 : i32
    return %arg0, %c0_i32 : i32, i32
  }
  func.func @transform_1(%arg0: i32) -> (i32, i32) {
    %c0_i32 = arith.constant 0 : i32
    %c0_i32_0 = arith.constant 0 : i32
    %c0_i32_1 = arith.constant 0 : i32
    return %c0_i32, %c0_i32_0 : i32, i32
  }
  func.func @transform_2(%arg0: i32) -> (i32, i32) {
    %c0_i32 = arith.constant 0 : i32
    %c0_i32_0 = arith.constant 0 : i32
    return %arg0, %c0_i32 : i32, i32
  }
}

</mosaic_0001>

<llo_original>
// kernel: tpu_custom_call.1
$region0: #{tpu_custom_call.1}
  #allocation0 [shape = 'u32[]', space=smem, size = 0x4, offset = 0x4, fixed_abs, tag = 'smem constant byte address 0x4 - core index']
  #allocation1 [shape = 'u32[72,128]{1,0:T(1,128)}', space=vmem, size = 0x9000, scoped, tag = 'internal scratch']
  %s0 = inlined_call_operand.vmem [shape: f32[16,8], index: 0, kind: input, shape index: {}]
  %s1 = inlined_call_operand.vmem [shape: f32[8,8], index: 1, kind: input, shape index: {}]
  %s2 = inlined_call_operand.vmem [shape: f32[16,8], index: 2, kind: output, shape index: {}]
  %s3 = sld [smem:[#allocation0]]
  $region18: #{tpu_custom_call.1} parent=0
    _
  %s5 = ssub.s32 1, %s3
  %s6 = scalar_select 0, %s5, %s3
  // Predicated region
  $region2: #{tpu_custom_call.1} parent=0 // pred_check
    _
  $region3: #{tpu_custom_call.1} parent=0 // pred_check_branch
    %8 = sbr.rel (0) target = $region5
  $region4: #{tpu_custom_call.1} parent=0 // pred_region
    _
  $region5: #{tpu_custom_call.1} parent=0 // pred_fallthru
    _
  // Predicated region
  $region6: #{tpu_custom_call.1} parent=0 // pred_check
    _
  $region7: #{tpu_custom_call.1} parent=0 // pred_check_branch
    %10 = sbr.rel (0) target = $region9
  $region8: #{tpu_custom_call.1} parent=0 // pred_region
    _
  $region9: #{tpu_custom_call.1} parent=0 // pred_fallthru
    _
  %v11 = vld [vmem:[%s0] sm:$0xff]
  %v12 = vld [vmem:[%s0 + $0x8] sm:$0xff]
  %v13 = vld [vmem:[%s1] sm:$0xff]
  %vm14 = vcmask 64512
  %v16 = vsel %vm14, %v11, 0
  %v19 = vsel %vm14, %v12, 0
  %v22 = vsel %vm14, %v13, 0
  %24 = vmatpush.xpose.msra.mxu0 0.0
  %25 = vmatpush.xpose.msra.mxu0 0.0
  %26 = vmatpush.xpose.msra.mxu0 0.0
  %27 = vmatpush.xpose.msra.mxu0 0.0
  %28 = vmatpush.xpose.msra.mxu0 0.0
  %29 = vmatpush.xpose.msra.mxu0 0.0
  %30 = vmatpush.xpose.msra.mxu0 0.0
  %31 = vmatpush.xpose.msra.mxu0 0.0
  %32 = vmatpush.xpose.msra.mxu0 0.0
  %33 = vmatpush.xpose.msra.mxu0 0.0
  %34 = vmatpush.xpose.msra.mxu0 0.0
  %35 = vmatpush.xpose.msra.mxu0 0.0
  %36 = vmatpush.xpose.msra.mxu0 0.0
  %37 = vmatpush.xpose.msra.mxu0 0.0
  %38 = vmatpush.xpose.msra.mxu0 0.0
  %39 = vmatpush.xpose.msra.mxu0 %v22
  %40 = vmatmul.f32.gmra.mxu0 %v16
  %v41 = vpop.f32.mrf.mxu0
  %v42 = vadd.f32 0.0, %v41
  %43 = vmatmul.f32.gmra.mxu0 %v19
  %v44 = vpop.f32.mrf.mxu0
  %v45 = vadd.f32 0.0, %v44
  %46 = vdwg.mxu0
  %47 = vst.msk [vmem:[%s2] sm:$0xff] %vm14, %v42
  %48 = vst.msk [vmem:[%s2 + $0x8] sm:$0xff] %vm14, %v45
  // Predicated region
  $region10: #{tpu_custom_call.1} parent=0 // pred_check
    _
  $region11: #{tpu_custom_call.1} parent=0 // pred_check_branch
    %50 = sbr.rel (0) target = $region13
  $region12: #{tpu_custom_call.1} parent=0 // pred_region
    _
  $region13: #{tpu_custom_call.1} parent=0 // pred_fallthru
    _
  // Predicated region
  $region14: #{tpu_custom_call.1} parent=0 // pred_check
    _
  $region15: #{tpu_custom_call.1} parent=0 // pred_check_branch
    %52 = sbr.rel (0) target = $region17
  $region16: #{tpu_custom_call.1} parent=0 // pred_region
    _
  $region17: #{tpu_custom_call.1} parent=0 // pred_fallthru
    _

</llo_original>
